<compile_context>
chip_gen: v7x
topology: tpu7x:2x2x1
jax: 0.10.0
libtpu: 0.0.40
codegen_flags: <defaults>
</compile_context>

<pallas_src>
import jax
import jax.numpy as jnp
from jax.experimental import pallas as pl
from jax.experimental.pallas import tpu as pltpu

LANES = 128
SUBL = 16            # 9 board features + 1 bias-ones row, padded to bf16 sublane tile
PARAM_ROWS = 160     # 128 (fused weight) + 16 (linear2 weight) + 16 (linear2 bias col)
MAX_TB = 4096        # max batch (lane) tile; fits default scoped VMEM on v5e/v6e/v7x


def ccnn_kernel(x_ref, p_ref, o_ref):
    """One batch tile of the CCNN forward, batch on the lane axis.

    x_ref : (16, TB) bf16 -- rows 0:9 = flattened 3x3 board (one board per lane),
                             row 9 = 1.0 (folds linear1 bias), rows 10:15 = 0
    p_ref : (160, 128) bf16 packed parameter slab:
              rows   0:128, lanes 0:16  -> fused (linear1 @ conv1) weight,
                                           column 9 = linear1 bias
              rows 128:144, lanes 0:128 -> linear2 weight (rows 0:9 valid)
              rows 144:160, lane 0      -> linear2 bias (rows 0:9 valid)
    o_ref : (16, TB) bf16 -- rows 0:9 = tanh(linear2(relu(...))) per board
    """
    x = x_ref[...]                                     # (16, TB) bf16
    wf = p_ref[0:128, 0:16]                            # (128, 16) bf16
    w2 = p_ref[128:144, :]                             # (16, 128) bf16
    b2 = p_ref[144:160, 0:1].astype(jnp.float32)       # (16, 1)

    # fused conv1 + linear1 (+ bias via the ones row), ReLU in f32
    h1 = jnp.dot(wf, x, preferred_element_type=jnp.float32)     # (128, TB) f32
    h1 = jnp.maximum(h1, 0.0).astype(jnp.bfloat16)

    # linear2 + bias + tanh; padded rows/lanes are sliced away in the wrapper
    out = jnp.dot(w2, h1, preferred_element_type=jnp.float32)   # (16, TB) f32
    o_ref[...] = jnp.tanh(out + b2).astype(o_ref.dtype)


def prepare_params(conv_w, lin1_w, lin1_b, lin2_w, lin2_b):
    """Packed (160,128) bf16 parameter slab (built ONCE, off the per-call path)."""
    wc = conv_w.reshape(64, 9).astype(jnp.float32)   # Conv2d weight, row-major flatten
    w1 = lin1_w.astype(jnp.float32)                  # (128, 64)
    w_fused = w1 @ wc                                # (128, 9): conv1 and linear1 fused (f32)

    slab = jnp.zeros((PARAM_ROWS, LANES), jnp.float32)
    slab = slab.at[0:128, 0:9].set(w_fused)
    slab = slab.at[0:128, 9].set(lin1_b.astype(jnp.float32))     # folded via ones row
    slab = slab.at[128:137, 0:128].set(lin2_w.astype(jnp.float32))
    slab = slab.at[144:153, 0].set(lin2_b.astype(jnp.float32))
    return slab.astype(jnp.bfloat16)   # bf16 data movement; f32 accumulation in-kernel


def _round_up(x, m):
    return (x + m - 1) // m * m


def ccnn_forward_batched(states, params_slab):
    """states: (B,3,3). Returns (B,9) f32; row b matches CCNN.forward(states[b])."""
    B = states.shape[0]

    # Batch tile on the lane axis: multiple of 128, >=2 grid steps whenever the
    # batch allows (keeps both v7x TensorCores busy), capped at MAX_TB so the
    # per-step working set stays small on every generation.
    b_pad = _round_up(B, LANES)
    tb = min(MAX_TB, _round_up(max(b_pad // 2, LANES), LANES))
    b_pad = _round_up(b_pad, tb)

    # Batch-on-lanes input: only the cheap 9->16 sublane pad (no 128-lane
    # inflation per board); row 9 = 1.0 so linear1's bias rides the fused matmul.
    x_t = states.reshape(B, 9).T.astype(jnp.bfloat16)            # (9, B)
    xp = jnp.zeros((SUBL, b_pad), jnp.bfloat16)
    xp = xp.at[0:9, 0:B].set(x_t)
    xp = xp.at[9, :].set(1.0)

    out = pl.pallas_call(
        ccnn_kernel,
        out_shape=jax.ShapeDtypeStruct((SUBL, b_pad), jnp.bfloat16),
        grid=(b_pad // tb,),
        in_specs=[
            pl.BlockSpec((SUBL, tb), lambda i: (0, i)),           # boards: tile batch lanes
            pl.BlockSpec((PARAM_ROWS, LANES), lambda i: (0, 0)),  # params: fetched once
        ],
        out_specs=pl.BlockSpec((SUBL, tb), lambda i: (0, i)),     # lane-dense stores
        compiler_params=pltpu.CompilerParams(
            dimension_semantics=("parallel",),                    # shard tiles across TCs
        ),
    )(xp, params_slab)

    return out[0:9, 0:B].T.astype(jnp.float32)                    # (B, 9)


def ccnn_forward(state, params_slab):
    """state: (3,3). Returns (9,) f32, matching CCNN.forward."""
    return ccnn_forward_batched(state.reshape(1, 3, 3), params_slab)[0]


def _reference(state, conv_w, lin1_w, lin1_b, lin2_w, lin2_b):
    x = state.reshape(9).astype(jnp.float32)
    h = conv_w.reshape(64, 9).astype(jnp.float32) @ x
    y1 = jnp.maximum(lin1_w.astype(jnp.float32) @ h + lin1_b, 0.0)
    return jnp.tanh(lin2_w.astype(jnp.float32) @ y1 + lin2_b)


if __name__ == "__main__":
    key = jax.random.PRNGKey(0)
    ks = jax.random.split(key, 6)

    # Deterministic synthetic parameters (same shapes as the PyTorch module).
    conv_w = jax.random.normal(ks[0], (64, 1, 3, 3), jnp.float32) * 0.1   # Conv2d(1,64,3,bias=False)
    lin1_w = jax.random.normal(ks[1], (128, 64), jnp.float32) * 0.1       # Linear(64,128).weight
    lin1_b = jax.random.normal(ks[2], (128,), jnp.float32) * 0.1          # Linear(64,128).bias
    lin2_w = jax.random.normal(ks[3], (9, 128), jnp.float32) * 0.1        # Linear(128,9).weight
    lin2_b = jax.random.normal(ks[4], (9,), jnp.float32) * 0.1            # Linear(128,9).bias

    # One-time parameter packing (hoisted out of the per-call path).
    params_slab = jax.block_until_ready(
        prepare_params(conv_w, lin1_w, lin1_b, lin2_w, lin2_b))

    # Single board (exact module semantics).  bf16 data movement -> 2e-2 tolerance.
    state = jax.random.normal(ks[5], (3, 3), jnp.float32)
    out1 = jax.block_until_ready(ccnn_forward(state, params_slab))
    ref1 = _reference(state, conv_w, lin1_w, lin1_b, lin2_w, lin2_b)
    assert out1.shape == (9,)
    assert jnp.allclose(out1, ref1, atol=2e-2, rtol=2e-2), (out1, ref1)

    # Small batch of boards (one per lane column).
    B = 8
    states = jax.random.normal(jax.random.PRNGKey(1), (B, 3, 3), jnp.float32)
    out_b = jax.block_until_ready(ccnn_forward_batched(states, params_slab))
    assert out_b.shape == (B, 9)
    for b in range(B):
        ref_b = _reference(states[b], conv_w, lin1_w, lin1_b, lin2_w, lin2_b)
        assert jnp.allclose(out_b[b], ref_b, atol=2e-2, rtol=2e-2), (b, out_b[b], ref_b)

    print("KERNEL_OK")
</pallas_src>

<mosaic_0001>
module attributes {stable_mosaic.version = 11 : i64} {
  func.func @ccnn_kernel(%arg0: i32, %arg1: memref<16x128xbf16, #tpu.memory_space<vmem>>, %arg2: memref<160x128xbf16, #tpu.memory_space<vmem>>, %arg3: memref<16x128xbf16, #tpu.memory_space<vmem>>) attributes {dimension_semantics = [#tpu.dimension_semantics<parallel>], iteration_bounds = array<i64: 1>, scalar_prefetch = 0 : i64, scratch_operands = 0 : i64, tpu.core_type = #tpu.core_type<tc>, window_params = [{transform_indices = @transform_0, window_bounds = array<i64: 16, 128>}, {pipeline_mode = #tpu.pipeline_mode<synchronous>, transform_indices = @transform_1, window_bounds = array<i64: 160, 128>}, {transform_indices = @transform_2, window_bounds = array<i64: 16, 128>}]} {
    %c0 = arith.constant 0 : index
    %c0_0 = arith.constant 0 : index
    %0 = vector.load %arg1[%c0, %c0_0] : memref<16x128xbf16, #tpu.memory_space<vmem>>, vector<16x128xbf16>
    %c0_1 = arith.constant 0 : index
    %c0_2 = arith.constant 0 : index
    %1 = vector.load %arg2[%c0_1, %c0_2] : memref<160x128xbf16, #tpu.memory_space<vmem>>, vector<128x16xbf16>
    %c128 = arith.constant 128 : index
    %c0_3 = arith.constant 0 : index
    %2 = vector.load %arg2[%c128, %c0_3] : memref<160x128xbf16, #tpu.memory_space<vmem>>, vector<16x128xbf16>
    %c144 = arith.constant 144 : index
    %c0_4 = arith.constant 0 : index
    %3 = vector.load %arg2[%c144, %c0_4] : memref<160x128xbf16, #tpu.memory_space<vmem>>, vector<16x1xbf16>
    %4 = arith.extf %3 : vector<16x1xbf16> to vector<16x1xf32>
    %cst = arith.constant dense<0.000000e+00> : vector<128x128xf32>
    %5 = tpu.matmul %1, %0, %cst {dimension_numbers = #tpu.dot_dimension_numbers<[1], [0], [0], [1], [0, 0, 1, 1], [], []>} : vector<128x16xbf16>, vector<16x128xbf16>, vector<128x128xf32> -> vector<128x128xf32>
    %cst_5 = arith.constant 0.000000e+00 : f32
    %6 = vector.broadcast %cst_5 : f32 to vector<128x128xf32>
    %7 = arith.maximumf %5, %6 : vector<128x128xf32>
    %8 = arith.truncf %7 : vector<128x128xf32> to vector<128x128xbf16>
    %cst_6 = arith.constant dense<0.000000e+00> : vector<16x128xf32>
    %9 = tpu.matmul %2, %8, %cst_6 {dimension_numbers = #tpu.dot_dimension_numbers<[1], [0], [0], [1], [0, 0, 1, 1], [], []>} : vector<16x128xbf16>, vector<128x128xbf16>, vector<16x128xf32> -> vector<16x128xf32>
    %10 = vector.broadcast %4 : vector<16x1xf32> to vector<16x128xf32>
    %11 = arith.addf %9, %10 : vector<16x128xf32>
    %12 = math.tanh %11 : vector<16x128xf32>
    %13 = arith.truncf %12 : vector<16x128xf32> to vector<16x128xbf16>
    %c0_7 = arith.constant 0 : index
    %c0_8 = arith.constant 0 : index
    %14 = vector.load %arg3[%c0_7, %c0_8] : memref<16x128xbf16, #tpu.memory_space<vmem>>, vector<16x128xbf16>
    tpu.vector_store %arg3[%c0_7, %c0_8], %13 {strides = array<i32>} : memref<16x128xbf16, #tpu.memory_space<vmem>>, vector<16x128xbf16>,
    return
  }
  func.func @transform_0(%arg0: i32) -> (i32, i32) {
    %c0_i32 = arith.constant 0 : i32
    %c0_i32_0 = arith.constant 0 : i32
    return %c0_i32, %arg0 : i32, i32
  }
  func.func @transform_1(%arg0: i32) -> (i32, i32) {
    %c0_i32 = arith.constant 0 : i32
    %c0_i32_0 = arith.constant 0 : i32
    %c0_i32_1 = arith.constant 0 : i32
    return %c0_i32, %c0_i32_0 : i32, i32
  }
  func.func @transform_2(%arg0: i32) -> (i32, i32) {
    %c0_i32 = arith.constant 0 : i32
    %c0_i32_0 = arith.constant 0 : i32
    return %c0_i32, %arg0 : i32, i32
  }
}

</mosaic_0001>

<llo_original>
// kernel: tpu_custom_call.1
$region0: #{tpu_custom_call.1}
  #allocation0 [shape = 'u32[]', space=smem, size = 0x4, offset = 0x4, fixed_abs, tag = 'smem constant byte address 0x4 - core index']
  #allocation1 [shape = 'u32[144,128]{1,0:T(1,128)}', space=vmem, size = 0x12000, scoped, tag = 'internal scratch']
  %s0 = inlined_call_operand.hbm [shape: bf16[16,128], index: 0, kind: input, shape index: {}]
  %s1 = inlined_call_operand.hbm [shape: bf16[160,128], index: 1, kind: input, shape index: {}]
  %s2 = inlined_call_operand.hbm [shape: bf16[16,128], index: 2, kind: output, shape index: {}]
  %s3 = sld [smem:[#allocation0]]
  $region26: #{tpu_custom_call.1} parent=0
    _
  %s5 = ssub.s32 1, %s3
  %s6 = scalar_select 0, %s5, %s3
  $region1: #{tpu_custom_call.1} parent=0
    #allocation2 [shape = 'u8[4096]{0}', space=vmem, size = 0x1000, scoped, tag = 'input window, operand 0, single buffered']
    #allocation3 [shape = 's32[1]{0}', space=sflag, size = 0x4, scoped, tag = 'scoped memory for tpu_custom_call.1']
    #allocation4 [shape = 's32[1]{0}', space=sflag, size = 0x4, scoped, tag = 'scoped memory for tpu_custom_call.1']
    #allocation5 [shape = 'u8[40960]{0}', space=vmem, size = 0xa000, scoped, tag = 'input window, operand 1, single buffered']
    #allocation6 [shape = 's32[1]{0}', space=sflag, size = 0x4, scoped, tag = 'scoped memory for tpu_custom_call.1']
    #allocation7 [shape = 'u8[4096]{0}', space=vmem, size = 0x1000, scoped, tag = 'output window, operand 0, single buffered']
    %7 = vsyncpa [#allocation3], 0
    %8 = vsyncpa [#allocation6], 0
    %9 = vsyncpa [#allocation4], 0
    // Predicated region
    $region2: #{tpu_custom_call.1} parent=1 // pred_check
      _
    $region3: #{tpu_custom_call.1} parent=1 // pred_check_branch
      %11 = sbr.rel (0) target = $region5
    $region4: #{tpu_custom_call.1} parent=1 // pred_region
      %s13 = ssub.s32 128, 128
      %14 = vsyncadd [#allocation3], %s13
      %s15 = sshll.u32 [#allocation2], 4
      %s16 = int_to_ptr.vmem [resolvable:$true] %s15
      %21 = dma.hbm_to_vmem [thread:$0]  %s0, 128, %s16, [#allocation3], 64, 64, 4
    $region5: #{tpu_custom_call.1} parent=1 // pred_fallthru
      _
    // Predicated region
    $region6: #{tpu_custom_call.1} parent=1 // pred_check
      _
    $region7: #{tpu_custom_call.1} parent=1 // pred_check_branch
      %23 = sbr.rel (0) target = $region9
    $region8: #{tpu_custom_call.1} parent=1 // pred_region
      %s25 = ssub.s32 1280, 1280
      %26 = vsyncadd [#allocation6], %s25
      %s27 = sshll.u32 [#allocation5], 4
      %s28 = int_to_ptr.vmem [resolvable:$true] %s27
      %33 = dma.hbm_to_vmem [thread:$0]  %s1, 1280, %s28, [#allocation6], 64, 64, 4
    $region9: #{tpu_custom_call.1} parent=1 // pred_fallthru
      _
    // Predicated region
    $region10: #{tpu_custom_call.1} parent=1 // pred_check
      _
    $region11: #{tpu_custom_call.1} parent=1 // pred_check_branch
      %35 = sbr.rel (0) target = $region13
    $region12: #{tpu_custom_call.1} parent=1 // pred_region
      %36 = dma.done [#allocation3], 128
    $region13: #{tpu_custom_call.1} parent=1 // pred_fallthru
      _
    // Predicated region
    $region14: #{tpu_custom_call.1} parent=1 // pred_check
      _
    $region15: #{tpu_custom_call.1} parent=1 // pred_check_branch
      %38 = sbr.rel (0) target = $region17
    $region16: #{tpu_custom_call.1} parent=1 // pred_region
      %39 = dma.done [#allocation6], 1280
    $region17: #{tpu_custom_call.1} parent=1 // pred_fallthru
      _
    %v41 = vld [vmem:[#allocation2] sm:$0xf]
    %v42 = vld [vmem:[#allocation2 + $0x4] sm:$0xf]
    %v43 = vld [vmem:[#allocation5] sm:$0xf]
    %v44 = vld [vmem:[#allocation5 + $0x4] sm:$0xf]
    %v45 = vld [vmem:[#allocation5 + $0x8] sm:$0xf]
    %v46 = vld [vmem:[#allocation5 + $0xc] sm:$0xf]
    %v47 = vld [vmem:[#allocation5 + $0x10] sm:$0xf]
    %v48 = vld [vmem:[#allocation5 + $0x14] sm:$0xf]
    %v49 = vld [vmem:[#allocation5 + $0x18] sm:$0xf]
    %v50 = vld [vmem:[#allocation5 + $0x1c] sm:$0xf]
    %v51 = vld [vmem:[#allocation5 + $0x20] sm:$0xf]
    %v52 = vld [vmem:[#allocation5 + $0x24] sm:$0xf]
    %v53 = vld [vmem:[#allocation5 + $0x28] sm:$0xf]
    %v54 = vld [vmem:[#allocation5 + $0x2c] sm:$0xf]
    %v55 = vld [vmem:[#allocation5 + $0x30] sm:$0xf]
    %v56 = vld [vmem:[#allocation5 + $0x34] sm:$0xf]
    %v57 = vld [vmem:[#allocation5 + $0x38] sm:$0xf]
    %v58 = vld [vmem:[#allocation5 + $0x3c] sm:$0xf]
    %v59 = vld [vmem:[#allocation5 + $0x40] sm:$0xf]
    %v60 = vld [vmem:[#allocation5 + $0x44] sm:$0xf]
    %v61 = vld [vmem:[#allocation5 + $0x48] sm:$0xf]
    %v62 = vld [vmem:[#allocation5 + $0x4c] sm:$0xf]
    %v63 = vunpack.c.l.bf16 %v61
    %v64 = vunpack.c.l.bf16 %v62
    %v81 = vunpack.c.l.b16 %v43
    %v82 = vunpack.c.l.b16 %v44
    %v83 = vunpack.c.l.b16 %v45
    %v84 = vunpack.c.l.b16 %v46
    %v85 = vunpack.c.l.b16 %v47
    %v86 = vunpack.c.l.b16 %v48
    %v87 = vunpack.c.l.b16 %v49
    %v88 = vunpack.c.l.b16 %v50
    %v89 = vunpack.c.l.b16 %v51
    %v90 = vunpack.c.l.b16 %v52
    %v91 = vunpack.c.l.b16 %v53
    %v92 = vunpack.c.l.b16 %v54
    %v93 = vunpack.c.l.b16 %v55
    %v94 = vunpack.c.l.b16 %v56
    %v95 = vunpack.c.l.b16 %v57
    %v96 = vunpack.c.l.b16 %v58
    %v97 = vpack.c.b16 %v82, %v81
    %v98 = vpack.c.b16 %v84, %v83
    %v99 = vpack.c.b16 %v86, %v85
    %v100 = vpack.c.b16 %v88, %v87
    %v101 = vpack.c.b16 %v90, %v89
    %v102 = vpack.c.b16 %v92, %v91
    %v103 = vpack.c.b16 %v94, %v93
    %v104 = vpack.c.b16 %v96, %v95
    %v107 = vunpack.c.l.b16 %v41
    %v108 = vunpack.c.l.b16 %v42
    %v109 = vpack.c.b16 %v108, %v107
    %vm111 = vcmask 130048
    %v113 = vsel %vm111, %v97, 0
    %v116 = vsel %vm111, %v98, 0
    %v119 = vsel %vm111, %v99, 0
    %v122 = vsel %vm111, %v100, 0
    %v125 = vsel %vm111, %v101, 0
    %v128 = vsel %vm111, %v102, 0
    %v131 = vsel %vm111, %v103, 0
    %v134 = vsel %vm111, %v104, 0
    %136 = vmatprep.subr.bf16.mxu0 0
    %137 = vmatpush1.bf16.msra.mxu0 %v109
    %138 = vmatprep.subr.bf16.mxu0 0
    %139 = vmatpush1.bf16.msra.mxu0 0
    %140 = vmatprep.subr.bf16.mxu0 0
    %141 = vmatpush1.bf16.msra.mxu0 0
    %142 = vmatprep.subr.bf16.mxu0 0
    %143 = vmatpush1.bf16.msra.mxu0 0
    %144 = vmatprep.subr.bf16.mxu0 0
    %145 = vmatpush1.bf16.msra.mxu0 0
    %146 = vmatprep.subr.bf16.mxu0 0
    %147 = vmatpush1.bf16.msra.mxu0 0
    %148 = vmatprep.subr.bf16.mxu0 0
    %149 = vmatpush1.bf16.msra.mxu0 0
    %150 = vmatprep.subr.bf16.mxu0 0
    %151 = vmatpush1.bf16.msra.mxu0 0
    %152 = vmatprep.subr.bf16.mxu0 0
    %153 = vmatpush1.bf16.msra.mxu0 0
    %154 = vmatprep.subr.bf16.mxu0 0
    %155 = vmatpush1.bf16.msra.mxu0 0
    %156 = vmatprep.subr.bf16.mxu0 0
    %157 = vmatpush1.bf16.msra.mxu0 0
    %158 = vmatprep.subr.bf16.mxu0 0
    %159 = vmatpush1.bf16.msra.mxu0 0
    %160 = vmatprep.subr.bf16.mxu0 0
    %161 = vmatpush1.bf16.msra.mxu0 0
    %162 = vmatprep.subr.bf16.mxu0 0
    %163 = vmatpush1.bf16.msra.mxu0 0
    %164 = vmatprep.subr.bf16.mxu0 0
    %165 = vmatpush1.bf16.msra.mxu0 0
    %166 = vmatprep.subr.bf16.mxu0 0
    %167 = vmatpush1.bf16.msra.mxu0 0
    %168 = vmatprep.mubr.bf16.mxu0 0
    %169 = vmatmul.mubr.bf16.gmra.mrb[0].mxu0 %v113
    %v170 = vpop.f32.mrb[0].mxu0
    %v171 = vadd.f32 0.0, %v170
    %v172 = vpop.f32.mrb[0].mxu0
    %v173 = vpop.f32.mrb[0].mxu0
    %v174 = vadd.f32 0.0, %v173
    %v175 = vpop.f32.mrb[0].mxu0
    %176 = vmatprep.mubr.bf16.mxu0 0
    %177 = vmatmul.mubr.bf16.gmra.mrb[0].mxu0 %v116
    %v178 = vpop.f32.mrb[0].mxu0
    %v179 = vadd.f32 0.0, %v178
    %v180 = vpop.f32.mrb[0].mxu0
    %v181 = vpop.f32.mrb[0].mxu0
    %v182 = vadd.f32 0.0, %v181
    %v183 = vpop.f32.mrb[0].mxu0
    %184 = vmatprep.mubr.bf16.mxu0 0
    %185 = vmatmul.mubr.bf16.gmra.mrb[0].mxu0 %v119
    %v186 = vpop.f32.mrb[0].mxu0
    %v187 = vadd.f32 0.0, %v186
    %v188 = vpop.f32.mrb[0].mxu0
    %v189 = vpop.f32.mrb[0].mxu0
    %v190 = vadd.f32 0.0, %v189
    %v191 = vpop.f32.mrb[0].mxu0
    %192 = vmatprep.mubr.bf16.mxu0 0
    %193 = vmatmul.mubr.bf16.gmra.mrb[0].mxu0 %v122
    %v194 = vpop.f32.mrb[0].mxu0
    %v195 = vadd.f32 0.0, %v194
    %v196 = vpop.f32.mrb[0].mxu0
    %v197 = vpop.f32.mrb[0].mxu0
    %v198 = vadd.f32 0.0, %v197
    %v199 = vpop.f32.mrb[0].mxu0
    %200 = vmatprep.mubr.bf16.mxu0 0
    %201 = vmatmul.mubr.bf16.gmra.mrb[0].mxu0 %v125
    %v202 = vpop.f32.mrb[0].mxu0
    %v203 = vadd.f32 0.0, %v202
    %v204 = vpop.f32.mrb[0].mxu0
    %v205 = vpop.f32.mrb[0].mxu0
    %v206 = vadd.f32 0.0, %v205
    %v207 = vpop.f32.mrb[0].mxu0
    %208 = vmatprep.mubr.bf16.mxu0 0
    %209 = vmatmul.mubr.bf16.gmra.mrb[0].mxu0 %v128
    %v210 = vpop.f32.mrb[0].mxu0
    %v211 = vadd.f32 0.0, %v210
    %v212 = vpop.f32.mrb[0].mxu0
    %v213 = vpop.f32.mrb[0].mxu0
    %v214 = vadd.f32 0.0, %v213
    %v215 = vpop.f32.mrb[0].mxu0
    %216 = vmatprep.mubr.bf16.mxu0 0
    %217 = vmatmul.mubr.bf16.gmra.mrb[0].mxu0 %v131
    %v218 = vpop.f32.mrb[0].mxu0
    %v219 = vadd.f32 0.0, %v218
    %v220 = vpop.f32.mrb[0].mxu0
    %v221 = vpop.f32.mrb[0].mxu0
    %v222 = vadd.f32 0.0, %v221
    %v223 = vpop.f32.mrb[0].mxu0
    %224 = vmatprep.mubr.bf16.mxu0 0
    %225 = vmatmul.mubr.bf16.gmra.mrb[0].mxu0 %v134
    %v226 = vpop.f32.mrb[0].mxu0
    %v227 = vadd.f32 0.0, %v226
    %v228 = vpop.f32.mrb[0].mxu0
    %v229 = vpop.f32.mrb[0].mxu0
    %v230 = vadd.f32 0.0, %v229
    %v231 = vpop.f32.mrb[0].mxu0
    %232 = vdwg.mxu0
    %v233 = vmax.f32 %v171, 0.0
    %v234 = vmax.f32 %v174, 0.0
    %v235 = vmax.f32 %v179, 0.0
    %v236 = vmax.f32 %v182, 0.0
    %v237 = vmax.f32 %v187, 0.0
    %v238 = vmax.f32 %v190, 0.0
    %v239 = vmax.f32 %v195, 0.0
    %v240 = vmax.f32 %v198, 0.0
    %v241 = vmax.f32 %v203, 0.0
    %v242 = vmax.f32 %v206, 0.0
    %v243 = vmax.f32 %v211, 0.0
    %v244 = vmax.f32 %v214, 0.0
    %v245 = vmax.f32 %v219, 0.0
    %v246 = vmax.f32 %v222, 0.0
    %v247 = vmax.f32 %v227, 0.0
    %v248 = vmax.f32 %v230, 0.0
    %v249 = vpack.c.bf16 %v234, %v233
    %v250 = vpack.c.bf16 %v236, %v235
    %v251 = vpack.c.bf16 %v238, %v237
    %v252 = vpack.c.bf16 %v240, %v239
    %v253 = vpack.c.bf16 %v242, %v241
    %v254 = vpack.c.bf16 %v244, %v243
    %v255 = vpack.c.bf16 %v246, %v245
    %v256 = vpack.c.bf16 %v248, %v247
    %258 = vset.pattern.permute.xlu0 0
    %259 = vperm.xlu0 %258, %v63
    %v260 = vpop.permute.xlu0 %259
    %263 = vset.pattern.permute.xlu0 0
    %264 = vperm.xlu0 %263, %v64
    %v265 = vpop.permute.xlu0 %264
    %v269 = vunpack.c.l.b16 %v59
    %v270 = vunpack.c.l.b16 %v60
    %v271 = vpack.c.b16 %v270, %v269
    %273 = vmatprep.subr.bf16.mxu0 0
    %274 = vmatpush1.bf16.msra.mxu0 %v249
    %275 = vmatprep.subr.bf16.mxu0 0
    %276 = vmatpush1.bf16.msra.mxu0 %v250
    %277 = vmatprep.subr.bf16.mxu0 0
    %278 = vmatpush1.bf16.msra.mxu0 %v251
    %279 = vmatprep.subr.bf16.mxu0 0
    %280 = vmatpush1.bf16.msra.mxu0 %v252
    %281 = vmatprep.subr.bf16.mxu0 0
    %282 = vmatpush1.bf16.msra.mxu0 %v253
    %283 = vmatprep.subr.bf16.mxu0 0
    %284 = vmatpush1.bf16.msra.mxu0 %v254
    %285 = vmatprep.subr.bf16.mxu0 0
    %286 = vmatpush1.bf16.msra.mxu0 %v255
    %287 = vmatprep.subr.bf16.mxu0 0
    %288 = vmatpush1.bf16.msra.mxu0 %v256
    %289 = vmatprep.subr.bf16.mxu0 0
    %290 = vmatpush1.bf16.msra.mxu0 0
    %291 = vmatprep.subr.bf16.mxu0 0
    %292 = vmatpush1.bf16.msra.mxu0 0
    %293 = vmatprep.subr.bf16.mxu0 0
    %294 = vmatpush1.bf16.msra.mxu0 0
    %295 = vmatprep.subr.bf16.mxu0 0
    %296 = vmatpush1.bf16.msra.mxu0 0
    %297 = vmatprep.subr.bf16.mxu0 0
    %298 = vmatpush1.bf16.msra.mxu0 0
    %299 = vmatprep.subr.bf16.mxu0 0
    %300 = vmatpush1.bf16.msra.mxu0 0
    %301 = vmatprep.subr.bf16.mxu0 0
    %302 = vmatpush1.bf16.msra.mxu0 0
    %303 = vmatprep.subr.bf16.mxu0 0
    %304 = vmatpush1.bf16.msra.mxu0 0
    %305 = vmatprep.mubr.bf16.mxu0 0
    %306 = vmatmul.mubr.bf16.gmra.mrb[0].mxu0 %v271
    %v307 = vpop.f32.mrb[0].mxu0
    %v308 = vadd.f32 %v260, %v307
    %v309 = vpop.f32.mrb[0].mxu0
    %v310 = vpop.f32.mrb[0].mxu0
    %v311 = vadd.f32 %v265, %v310
    %v312 = vpop.f32.mrb[0].mxu0
    %313 = vdwg.mxu0
    %v314 = vtanh.pop %v308
    %v315 = vtanh.pop %v311
    %v316 = vpack.c.bf16 %v315, %v314
    %v318 = vunpack.c.l.b16 %v316
    %v319 = vunpack.c.h.b16 %v316
    %v320 = vpack.c.b16 %v318, %v318
    %v321 = vpack.c.b16 %v319, %v319
    %324 = vst [vmem:[#allocation7] sm:$0xf] %v320
    %325 = vst [vmem:[#allocation7 + $0x4] sm:$0xf] %v321
    // Predicated region
    $region18: #{tpu_custom_call.1} parent=1 // pred_check
      _
    $region19: #{tpu_custom_call.1} parent=1 // pred_check_branch
      %327 = sbr.rel (0) target = $region21
    $region20: #{tpu_custom_call.1} parent=1 // pred_region
      %s329 = ssub.s32 128, 128
      %330 = vsyncadd [#allocation4], %s329
      %s331 = sshll.u32 [#allocation7], 4
      %s332 = int_to_ptr.vmem [resolvable:$true] %s331
      %337 = dma.vmem_to_hbm [thread:$0]  %s332, 128, %s2, [#allocation4], 64, 64, 4
    $region21: #{tpu_custom_call.1} parent=1 // pred_fallthru
      _
    // Predicated region
    $region22: #{tpu_custom_call.1} parent=1 // pred_check
      _
    $region23: #{tpu_custom_call.1} parent=1 // pred_check_branch
      %339 = sbr.rel (0) target = $region25
    $region24: #{tpu_custom_call.1} parent=1 // pred_region
      %340 = dma.done [#allocation4], 128
    $region25: #{tpu_custom_call.1} parent=1 // pred_fallthru
      _
    %341 = vsyncpa [#allocation3], 1
    %342 = vsyncpa [#allocation6], 1
    %343 = vsyncpa [#allocation4], 1

</llo_original>
